<compile_context>
chip_gen: v6e
topology: v6e:2x2x1
jax: 0.10.0
libtpu: 0.0.40
codegen_flags: <defaults>
</compile_context>

<pallas_src>
import functools

import jax
import jax.numpy as jnp
import numpy as np
from jax.experimental import pallas as pl
from jax.experimental.pallas import tpu as pltpu

_LANE = 128


def _channel_attention_kernel(x_ref, w1t_ref, w2t_ref, o_ref,
                              sum_acc, max_acc, *, hw, hw_chunk, needs_mask):
    """Grid = (batch_blocks, hw_blocks); the HW axis is the reduction axis."""
    k = pl.program_id(1)
    k_last = pl.num_programs(1) - 1
    n_groups = hw_chunk // _LANE

    @pl.when(k == 0)
    def _init():
        sum_acc[...] = jnp.zeros_like(sum_acc)
        # -inf init is safe: every HW chunk (including the last, which starts
        # at k*hw_chunk < HW) contributes >= 1 valid column, so the final
        # cross-lane max is always taken over real data.
        max_acc[...] = jnp.full_like(max_acc, -jnp.inf)

    def accumulate(masked):
        s = sum_acc[...]                                   # (B, C, 128) f32
        m = max_acc[...]                                   # (B, C, 128) x-dtype
        if masked:
            base = k * hw_chunk
            lane_ids = jax.lax.broadcasted_iota(jnp.int32, (1, 1, _LANE), 2)
        for g in range(n_groups):
            # Static, lane-aligned slice of the current chunk.
            c = x_ref[:, :, g * _LANE:(g + 1) * _LANE]     # (B, C, 128)
            if masked:
                valid = (base + g * _LANE + lane_ids) < hw
                c_s = jnp.where(valid, c, jnp.array(0.0, dtype=c.dtype))
                c_m = jnp.where(valid, c, jnp.array(-jnp.inf, dtype=c.dtype))
            else:
                c_s = c
                c_m = c
            s = s + c_s.astype(jnp.float32)                # VPU only
            m = jnp.maximum(m, c_m)                        # VPU only, x dtype
        sum_acc[...] = s
        max_acc[...] = m

    if needs_mask:
        # Steady chunks are fully in-bounds -> no mask work in the hot loop.
        @pl.when(k != k_last)
        def _steady():
            accumulate(False)

        # Only the last chunk has an (unspecified-data) tail -> mask it for
        # BOTH the sum and the max branches.
        @pl.when(k == k_last)
        def _tail():
            accumulate(True)
    else:
        accumulate(False)

    @pl.when(k == k_last)
    def _finalize():
        b = o_ref.shape[0]
        # Single cross-lane (XLU) reduce per pooled branch.
        avg_p = jnp.sum(sum_acc[...], axis=-1) * (1.0 / hw)            # (B, C)
        max_p = jnp.max(max_acc[...], axis=-1).astype(jnp.float32)     # (B, C)

        # Fused tiny MLP over both pooled branches: one MXU matmul pair.
        p = jnp.concatenate([avg_p, max_p], axis=0)                    # (2B, C)
        h = jnp.dot(p, w1t_ref[...].astype(jnp.float32),
                    preferred_element_type=jnp.float32)                # (2B, Cr)
        h = h * jax.nn.sigmoid(h)                                      # SiLU
        y = jnp.dot(h, w2t_ref[...].astype(jnp.float32),
                    preferred_element_type=jnp.float32)                # (2B, C)
        o_ref[...] = jax.nn.sigmoid(y[:b] + y[b:]).astype(o_ref.dtype)


def channel_attention(x, w1, w2, *, b_tile=None, target_block_bytes=4 << 20):
    """x: (N, C, H, W); w1: (C_red, C, 1, 1); w2: (C, C_red, 1, 1).

    Returns sigmoid(mlp(avgpool(x)) + mlp(maxpool(x))) with shape (N, C, 1, 1).
    """
    N, C, H, W = x.shape
    C_red = w1.shape[0]
    HW = H * W
    x_dtype = x.dtype
    if not jnp.issubdtype(x_dtype, jnp.floating):
        raise ValueError("channel_attention expects floating activations")
    itemsize = jnp.dtype(x_dtype).itemsize
    w_itemsize = jnp.dtype(w1.dtype).itemsize

    # --- batch tile: multiple of 8 (layout-friendly output block) or == N ---
    if b_tile is None:
        if N <= 8:
            b_tile = N          # single batch block equal to the full dim
        elif N < 32:
            b_tile = 8          # >= 2 batch blocks -> both v7x TCs get work
        else:
            b_tile = 16

    # --- spatial chunk: multiple of 128 lanes sized to ~target_block_bytes ---
    VMEM_BUDGET = 40 << 20      # conservative across v5e / v6e / v7x
    acc_bytes = b_tile * C * _LANE * (4 + itemsize)   # f32 sum + x-dtype max
    w_bytes = 2 * C * C_red * w_itemsize
    bytes_per_lane_group = max(1, b_tile * C * _LANE * itemsize)
    max_groups = max(1, int(target_block_bytes) // bytes_per_lane_group)
    budget_groups = max(1, (VMEM_BUDGET - acc_bytes - 2 * w_bytes)
                        // (2 * bytes_per_lane_group))
    max_groups = min(max_groups, budget_groups, 64)   # cap unroll length

    hw_ceil = pl.cdiv(HW, _LANE) * _LANE
    hw_chunk = min(hw_ceil, max_groups * _LANE)
    # Rebalance to near-equal chunks (still multiples of 128): minimises the
    # masked / overhanging tail work on the last chunk.
    n_chunks = pl.cdiv(HW, hw_chunk)
    hw_chunk = pl.cdiv(pl.cdiv(HW, n_chunks), _LANE) * _LANE
    n_chunks = pl.cdiv(HW, hw_chunk)
    needs_mask = (HW % hw_chunk) != 0

    # --- layout prep (no HBM pad/copy: reshape of a contiguous array) -------
    x_flat = x.reshape(N, C, HW)
    w1t = w1[:, :, 0, 0].T            # (C, C_red)   1x1 conv == matmul
    w2t = w2[:, :, 0, 0].T            # (C_red, C)

    grid = (pl.cdiv(N, b_tile), n_chunks)

    kernel = functools.partial(
        _channel_attention_kernel,
        hw=HW, hw_chunk=hw_chunk, needs_mask=needs_mask)

    block_bytes = b_tile * C * hw_chunk * itemsize
    vmem_need = (2 * block_bytes              # double-buffered input blocks
                 + acc_bytes                  # lane-wide accumulators
                 + 2 * w_bytes                # (conservatively) buffered weights
                 + 2 * b_tile * C * itemsize)  # output block
    vmem_limit = int(min(max(vmem_need + (4 << 20), 16 << 20), 48 << 20))

    cost = pl.CostEstimate(
        flops=2 * N * C * HW + 2 * 2 * (2 * N) * C * C_red,
        transcendentals=N * (2 * C_red + C),
        bytes_accessed=(N * C * HW * itemsize
                        + 2 * C * C_red * w_itemsize
                        + N * C * itemsize),
    )

    out = pl.pallas_call(
        kernel,
        out_shape=jax.ShapeDtypeStruct((N, C), x_dtype),
        grid_spec=pltpu.PrefetchScalarGridSpec(
            num_scalar_prefetch=0,
            grid=grid,
            in_specs=[
                pl.BlockSpec((b_tile, C, hw_chunk), lambda b, k: (b, 0, k)),
                pl.BlockSpec((C, C_red), lambda b, k: (0, 0)),
                pl.BlockSpec((C_red, C), lambda b, k: (0, 0)),
            ],
            out_specs=pl.BlockSpec((b_tile, C), lambda b, k: (b, 0)),
            scratch_shapes=[
                pltpu.VMEM((b_tile, C, _LANE), jnp.float32),   # running sums
                pltpu.VMEM((b_tile, C, _LANE), x_dtype),       # running maxes
            ],
        ),
        compiler_params=pltpu.CompilerParams(
            dimension_semantics=("parallel", "arbitrary"),
            vmem_limit_bytes=vmem_limit),
        cost_estimate=cost,
    )(x_flat, w1t, w2t)

    return out.reshape(N, C, 1, 1)


def reference(x, w1, w2):
    # Pure-JAX reference of the PyTorch forward.
    avg_p = jnp.mean(x, axis=(2, 3))               # (N, C)
    max_p = jnp.max(x, axis=(2, 3))                # (N, C)
    w1m = w1[:, :, 0, 0]                           # (C_red, C)
    w2m = w2[:, :, 0, 0]                           # (C, C_red)

    def mlp(p):
        h = p @ w1m.T
        h = h * jax.nn.sigmoid(h)
        return h @ w2m.T

    return jax.nn.sigmoid(mlp(avg_p) + mlp(max_p))[:, :, None, None]


def _run_case(key, N, C, H, W, reduction_ratio, **kw):
    C_red = max(1, C // reduction_ratio)
    kx, k1, k2 = jax.random.split(key, 3)
    x = jax.random.normal(kx, (N, C, H, W), dtype=jnp.float32)
    # Conv2d(C, C_red, 1, bias=False).weight -> (C_red, C, 1, 1)
    w1 = jax.random.normal(k1, (C_red, C, 1, 1), dtype=jnp.float32) * 0.1
    # Conv2d(C_red, C, 1, bias=False).weight -> (C, C_red, 1, 1)
    w2 = jax.random.normal(k2, (C, C_red, 1, 1), dtype=jnp.float32) * 0.1
    out = jax.block_until_ready(channel_attention(x, w1, w2, **kw))
    ref = jax.block_until_ready(reference(x, w1, w2))
    np.testing.assert_allclose(np.asarray(out), np.asarray(ref),
                               rtol=1e-5, atol=1e-5)


if __name__ == "__main__":
    key = jax.random.PRNGKey(0)
    k0, k1, k2 = jax.random.split(key, 3)

    # Main case: matches the module defaults (channels=64, reduction=16).
    _run_case(k0, N=2, C=64, H=16, W=16, reduction_ratio=16)

    # Tail / partial-block coverage (review correctness concerns):
    #  * HW not a multiple of 128  -> masked last chunk, block overhangs HW
    #  * N not a multiple of b_tile -> partial batch / output blocks
    #  * several HW chunks          -> init / steady / masked-tail / finalize
    _run_case(k1, N=3, C=32, H=9, W=9, reduction_ratio=8)
    _run_case(k2, N=10, C=64, H=20, W=20, reduction_ratio=16,
              target_block_bytes=64 << 10)

    print("KERNEL_OK")
</pallas_src>

<mosaic_0001>
module attributes {stable_mosaic.version = 11 : i64} {
  func.func @_channel_attention_kernel(%arg0: i32, %arg1: i32, %arg2: memref<2x64x256xf32, #tpu.memory_space<vmem>>, %arg3: memref<64x4xf32, #tpu.memory_space<vmem>>, %arg4: memref<4x64xf32, #tpu.memory_space<vmem>>, %arg5: memref<2x64xf32, #tpu.memory_space<vmem>>, %arg6: memref<2x64x128xf32, #tpu.memory_space<vmem>>, %arg7: memref<2x64x128xf32, #tpu.memory_space<vmem>>) attributes {dimension_semantics = [#tpu.dimension_semantics<parallel>, #tpu.dimension_semantics<arbitrary>], iteration_bounds = array<i64: 1, 1>, scalar_prefetch = 0 : i64, scratch_operands = 2 : i64, tpu.core_type = #tpu.core_type<tc>, window_params = [{transform_indices = @transform_0, window_bounds = array<i64: 2, 64, 256>}, {pipeline_mode = #tpu.pipeline_mode<synchronous>, transform_indices = @transform_1, window_bounds = array<i64: 64, 4>}, {pipeline_mode = #tpu.pipeline_mode<synchronous>, transform_indices = @transform_2, window_bounds = array<i64: 4, 64>}, {transform_indices = @transform_3, window_bounds = array<i64: 2, 64>}]} {
    %c0_i32 = arith.constant 0 : i32
    %0 = arith.cmpi eq, %arg1, %c0_i32 : i32
    %1 = arith.extui %0 : i1 to i32
    %c0_i32_0 = arith.constant 0 : i32
    %2 = arith.cmpi ne, %1, %c0_i32_0 : i32
    scf.if %2 {
      %cst = arith.constant 0.000000e+00 : f32
      %16 = vector.broadcast %cst : f32 to vector<2x64x128xf32>
      %c0_19 = arith.constant 0 : index
      %c0_20 = arith.constant 0 : index
      %c0_21 = arith.constant 0 : index
      %17 = vector.load %arg6[%c0_19, %c0_20, %c0_21] : memref<2x64x128xf32, #tpu.memory_space<vmem>>, vector<2x64x128xf32>
      tpu.vector_store %arg6[%c0_19, %c0_20, %c0_21], %16 {strides = array<i32>} : memref<2x64x128xf32, #tpu.memory_space<vmem>>, vector<2x64x128xf32>,
      %cst_22 = arith.constant 0xFF800000 : f32
      %18 = vector.broadcast %cst_22 : f32 to vector<2x64x128xf32>
      %c0_23 = arith.constant 0 : index
      %c0_24 = arith.constant 0 : index
      %c0_25 = arith.constant 0 : index
      %19 = vector.load %arg7[%c0_23, %c0_24, %c0_25] : memref<2x64x128xf32, #tpu.memory_space<vmem>>, vector<2x64x128xf32>
      tpu.vector_store %arg7[%c0_23, %c0_24, %c0_25], %18 {strides = array<i32>} : memref<2x64x128xf32, #tpu.memory_space<vmem>>, vector<2x64x128xf32>,
    } else {
    }
    %c0 = arith.constant 0 : index
    %c0_1 = arith.constant 0 : index
    %c0_2 = arith.constant 0 : index
    %3 = vector.load %arg6[%c0, %c0_1, %c0_2] : memref<2x64x128xf32, #tpu.memory_space<vmem>>, vector<2x64x128xf32>
    %c0_3 = arith.constant 0 : index
    %c0_4 = arith.constant 0 : index
    %c0_5 = arith.constant 0 : index
    %4 = vector.load %arg7[%c0_3, %c0_4, %c0_5] : memref<2x64x128xf32, #tpu.memory_space<vmem>>, vector<2x64x128xf32>
    %c0_6 = arith.constant 0 : index
    %c0_7 = arith.constant 0 : index
    %c0_8 = arith.constant 0 : index
    %5 = vector.load %arg2[%c0_6, %c0_7, %c0_8] : memref<2x64x256xf32, #tpu.memory_space<vmem>>, vector<2x64x128xf32>
    %6 = arith.addf %3, %5 : vector<2x64x128xf32>
    %7 = arith.maximumf %4, %5 : vector<2x64x128xf32>
    %c0_9 = arith.constant 0 : index
    %c0_10 = arith.constant 0 : index
    %c128 = arith.constant 128 : index
    %8 = vector.load %arg2[%c0_9, %c0_10, %c128] : memref<2x64x256xf32, #tpu.memory_space<vmem>>, vector<2x64x128xf32>
    %9 = arith.addf %6, %8 : vector<2x64x128xf32>
    %10 = arith.maximumf %7, %8 : vector<2x64x128xf32>
    %c0_11 = arith.constant 0 : index
    %c0_12 = arith.constant 0 : index
    %c0_13 = arith.constant 0 : index
    %11 = vector.load %arg6[%c0_11, %c0_12, %c0_13] : memref<2x64x128xf32, #tpu.memory_space<vmem>>, vector<2x64x128xf32>
    tpu.vector_store %arg6[%c0_11, %c0_12, %c0_13], %9 {strides = array<i32>} : memref<2x64x128xf32, #tpu.memory_space<vmem>>, vector<2x64x128xf32>,
    %c0_14 = arith.constant 0 : index
    %c0_15 = arith.constant 0 : index
    %c0_16 = arith.constant 0 : index
    %12 = vector.load %arg7[%c0_14, %c0_15, %c0_16] : memref<2x64x128xf32, #tpu.memory_space<vmem>>, vector<2x64x128xf32>
    tpu.vector_store %arg7[%c0_14, %c0_15, %c0_16], %10 {strides = array<i32>} : memref<2x64x128xf32, #tpu.memory_space<vmem>>, vector<2x64x128xf32>,
    %c0_i32_17 = arith.constant 0 : i32
    %13 = arith.cmpi eq, %arg1, %c0_i32_17 : i32
    %14 = arith.extui %13 : i1 to i32
    %c0_i32_18 = arith.constant 0 : i32
    %15 = arith.cmpi ne, %14, %c0_i32_18 : i32
    scf.if %15 {
      %c0_19 = arith.constant 0 : index
      %c0_20 = arith.constant 0 : index
      %c0_21 = arith.constant 0 : index
      %16 = vector.load %arg6[%c0_19, %c0_20, %c0_21] : memref<2x64x128xf32, #tpu.memory_space<vmem>>, vector<2x64x128xf32>
      %cst = arith.constant dense<0.000000e+00> : vector<2x64xf32>
      %17 = vector.multi_reduction <add>, %16, %cst [2] : vector<2x64x128xf32> to vector<2x64xf32>
      %cst_22 = arith.constant 3.906250e-03 : f32
      %18 = vector.broadcast %cst_22 : f32 to vector<2x64xf32>
      %19 = arith.mulf %17, %18 : vector<2x64xf32>
      %c0_23 = arith.constant 0 : index
      %c0_24 = arith.constant 0 : index
      %c0_25 = arith.constant 0 : index
      %20 = vector.load %arg7[%c0_23, %c0_24, %c0_25] : memref<2x64x128xf32, #tpu.memory_space<vmem>>, vector<2x64x128xf32>
      %cst_26 = arith.constant dense<0xFF800000> : vector<2x64xf32>
      %21 = vector.multi_reduction <maximumf>, %20, %cst_26 [2] : vector<2x64x128xf32> to vector<2x64xf32>
      %22 = tpu.concatenate %19, %21 in 0 : vector<2x64xf32>, vector<2x64xf32> -> vector<4x64xf32>
      %c0_27 = arith.constant 0 : index
      %c0_28 = arith.constant 0 : index
      %23 = vector.load %arg3[%c0_27, %c0_28] : memref<64x4xf32, #tpu.memory_space<vmem>>, vector<64x4xf32>
      %cst_29 = arith.constant dense<0.000000e+00> : vector<4x4xf32>
      %24 = tpu.matmul %22, %23, %cst_29 {dimension_numbers = #tpu.dot_dimension_numbers<[1], [0], [0], [1], [0, 0, 1, 1], [], []>} : vector<4x64xf32>, vector<64x4xf32>, vector<4x4xf32> -> vector<4x4xf32>
      %25 = arith.negf %24 : vector<4x4xf32>
      %26 = math.exp %25 : vector<4x4xf32>
      %cst_30 = arith.constant 1.000000e+00 : f32
      %27 = vector.broadcast %cst_30 : f32 to vector<4x4xf32>
      %28 = arith.addf %27, %26 : vector<4x4xf32>
      %29 = arith.divf %27, %28 : vector<4x4xf32>
      %30 = arith.mulf %24, %29 : vector<4x4xf32>
      %c0_31 = arith.constant 0 : index
      %c0_32 = arith.constant 0 : index
      %31 = vector.load %arg4[%c0_31, %c0_32] : memref<4x64xf32, #tpu.memory_space<vmem>>, vector<4x64xf32>
      %cst_33 = arith.constant dense<0.000000e+00> : vector<4x64xf32>
      %32 = tpu.matmul %30, %31, %cst_33 {dimension_numbers = #tpu.dot_dimension_numbers<[1], [0], [0], [1], [0, 0, 1, 1], [], []>} : vector<4x4xf32>, vector<4x64xf32>, vector<4x64xf32> -> vector<4x64xf32>
      %33 = vector.extract_strided_slice %32 {offsets = [0, 0], sizes = [2, 64], strides = [1, 1]} : vector<4x64xf32> to vector<2x64xf32>
      %34 = vector.extract_strided_slice %32 {offsets = [2, 0], sizes = [2, 64], strides = [1, 1]} : vector<4x64xf32> to vector<2x64xf32>
      %35 = arith.addf %33, %34 : vector<2x64xf32>
      %36 = arith.negf %35 : vector<2x64xf32>
      %37 = math.exp %36 : vector<2x64xf32>
      %cst_34 = arith.constant 1.000000e+00 : f32
      %38 = vector.broadcast %cst_34 : f32 to vector<2x64xf32>
      %39 = arith.addf %38, %37 : vector<2x64xf32>
      %40 = arith.divf %38, %39 : vector<2x64xf32>
      %c0_35 = arith.constant 0 : index
      %c0_36 = arith.constant 0 : index
      %41 = vector.load %arg5[%c0_35, %c0_36] : memref<2x64xf32, #tpu.memory_space<vmem>>, vector<2x64xf32>
      tpu.vector_store %arg5[%c0_35, %c0_36], %40 {strides = array<i32>} : memref<2x64xf32, #tpu.memory_space<vmem>>, vector<2x64xf32>,
    } else {
    }
    return
  }
  func.func @transform_0(%arg0: i32, %arg1: i32) -> (i32, i32, i32) {
    %c0_i32 = arith.constant 0 : i32
    %c0_i32_0 = arith.constant 0 : i32
    return %arg0, %c0_i32, %arg1 : i32, i32, i32
  }
  func.func @transform_1(%arg0: i32, %arg1: i32) -> (i32, i32) {
    %c0_i32 = arith.constant 0 : i32
    %c0_i32_0 = arith.constant 0 : i32
    %c0_i32_1 = arith.constant 0 : i32
    return %c0_i32, %c0_i32_0 : i32, i32
  }
  func.func @transform_2(%arg0: i32, %arg1: i32) -> (i32, i32) {
    %c0_i32 = arith.constant 0 : i32
    %c0_i32_0 = arith.constant 0 : i32
    %c0_i32_1 = arith.constant 0 : i32
    return %c0_i32, %c0_i32_0 : i32, i32
  }
  func.func @transform_3(%arg0: i32, %arg1: i32) -> (i32, i32) {
    %c0_i32 = arith.constant 0 : i32
    %c0_i32_0 = arith.constant 0 : i32
    return %arg0, %c0_i32 : i32, i32
  }
}

</mosaic_0001>

<llo_original>
// kernel: tpu_custom_call.1
$region0: #{tpu_custom_call.1}
  #allocation0 [shape = 'u32[]', space=smem, size = 0x4, offset = 0x4, fixed_abs, tag = 'smem constant byte address 0x4 - core index']
  #allocation1 [shape = 'u32[144,128]{1,0:T(1,128)}', space=vmem, size = 0x12000, scoped, tag = 'internal scratch']
  #allocation2 [shape = 'f32[2,64,128]{2,1,0:T(8,128)}', space=vmem, size = 0x10000, scoped, tag = 'scratch operand']
  #allocation3 [shape = 'f32[2,64,128]{2,1,0:T(8,128)}', space=vmem, size = 0x10000, scoped, tag = 'scratch operand']
  %s0 = inlined_call_operand.hbm [shape: f32[2,64,256], index: 0, kind: input, shape index: {}]
  %s1 = inlined_call_operand.vmem [shape: f32[64,4], index: 1, kind: input, shape index: {}]
  %s2 = inlined_call_operand.vmem [shape: f32[4,64], index: 2, kind: input, shape index: {}]
  %s3 = inlined_call_operand.hbm [shape: f32[2,64], index: 3, kind: output, shape index: {}]
  %s4 = sld [smem:[#allocation0]]
  $region34: #{tpu_custom_call.1} parent=0
    _
  %s6 = ssub.s32 1, %s4
  %s7 = scalar_select 0, %s6, %s4
  $region1: #{tpu_custom_call.1} parent=0
    #allocation4 [shape = 'u8[131072]{0}', space=vmem, size = 0x20000, scoped, tag = 'input window, operand 0, single buffered']
    #allocation5 [shape = 's32[1]{0}', space=sflag, size = 0x4, scoped, tag = 'scoped memory for tpu_custom_call.1']
    #allocation6 [shape = 's32[1]{0}', space=sflag, size = 0x4, scoped, tag = 'scoped memory for tpu_custom_call.1']
    #allocation7 [shape = 'u8[1024]{0}', space=vmem, size = 0x400, scoped, tag = 'output window, operand 0, single buffered']
    %8 = vsyncpa [#allocation5], 0
    %9 = vsyncpa [#allocation6], 0
    // Predicated region
    $region2: #{tpu_custom_call.1} parent=1 // pred_check
      _
    $region3: #{tpu_custom_call.1} parent=1 // pred_check_branch
      %11 = sbr.rel (0) target = $region5
    $region4: #{tpu_custom_call.1} parent=1 // pred_region
      %s13 = ssub.s32 4096, 4096
      %14 = vsyncadd [#allocation5], %s13
      %s15 = sshll.u32 [#allocation4], 4
      %s16 = int_to_ptr.vmem [resolvable:$true] %s15
      %21 = dma.hbm_to_vmem [thread:$0]  %s0, 4096, %s16, [#allocation5], 256, 256, 16
    $region5: #{tpu_custom_call.1} parent=1 // pred_fallthru
      _
    // Predicated region
    $region6: #{tpu_custom_call.1} parent=1 // pred_check
      _
    $region7: #{tpu_custom_call.1} parent=1 // pred_check_branch
      %23 = sbr.rel (0) target = $region9
    $region8: #{tpu_custom_call.1} parent=1 // pred_region
      _
    $region9: #{tpu_custom_call.1} parent=1 // pred_fallthru
      _
    // Predicated region
    $region10: #{tpu_custom_call.1} parent=1 // pred_check
      _
    $region11: #{tpu_custom_call.1} parent=1 // pred_check_branch
      %25 = sbr.rel (0) target = $region13
    $region12: #{tpu_custom_call.1} parent=1 // pred_region
      _
    $region13: #{tpu_custom_call.1} parent=1 // pred_fallthru
      _
    // Predicated region
    $region14: #{tpu_custom_call.1} parent=1 // pred_check
      _
    $region15: #{tpu_custom_call.1} parent=1 // pred_check_branch
      %27 = sbr.rel (0) target = $region17
    $region16: #{tpu_custom_call.1} parent=1 // pred_region
      %28 = dma.done [#allocation5], 4096
    $region17: #{tpu_custom_call.1} parent=1 // pred_fallthru
      _
    %p29 = scmp.eq.s32.totalorder 0, 0
    // Predicated region
    $region18: #{tpu_custom_call.1} parent=1 // pred_check
      %p30 = pneg %p29
    $region19: #{tpu_custom_call.1} parent=1 // pred_check_branch
      %32 = sbr.rel (%p30) target = $region21
    $region20: #{tpu_custom_call.1} parent=1 // pred_region
      %33 = vst [vmem:[#allocation2] sm:$0xff] 0.0
      %34 = vst [vmem:[#allocation2 + $0x8] sm:$0xff] 0.0
      %35 = vst [vmem:[#allocation2 + $0x10] sm:$0xff] 0.0
      %36 = vst [vmem:[#allocation2 + $0x18] sm:$0xff] 0.0
      %37 = vst [vmem:[#allocation2 + $0x20] sm:$0xff] 0.0
      %38 = vst [vmem:[#allocation2 + $0x28] sm:$0xff] 0.0
      %39 = vst [vmem:[#allocation2 + $0x30] sm:$0xff] 0.0
      %40 = vst [vmem:[#allocation2 + $0x38] sm:$0xff] 0.0
      %41 = vst [vmem:[#allocation2 + $0x40] sm:$0xff] 0.0
      %42 = vst [vmem:[#allocation2 + $0x48] sm:$0xff] 0.0
      %43 = vst [vmem:[#allocation2 + $0x50] sm:$0xff] 0.0
      %44 = vst [vmem:[#allocation2 + $0x58] sm:$0xff] 0.0
      %45 = vst [vmem:[#allocation2 + $0x60] sm:$0xff] 0.0
      %46 = vst [vmem:[#allocation2 + $0x68] sm:$0xff] 0.0
      %47 = vst [vmem:[#allocation2 + $0x70] sm:$0xff] 0.0
      %48 = vst [vmem:[#allocation2 + $0x78] sm:$0xff] 0.0
      %49 = vst [vmem:[#allocation3] sm:$0xff] -inf
      %50 = vst [vmem:[#allocation3 + $0x8] sm:$0xff] -inf
      %51 = vst [vmem:[#allocation3 + $0x10] sm:$0xff] -inf
      %52 = vst [vmem:[#allocation3 + $0x18] sm:$0xff] -inf
      %53 = vst [vmem:[#allocation3 + $0x20] sm:$0xff] -inf
      %54 = vst [vmem:[#allocation3 + $0x28] sm:$0xff] -inf
      %55 = vst [vmem:[#allocation3 + $0x30] sm:$0xff] -inf
      %56 = vst [vmem:[#allocation3 + $0x38] sm:$0xff] -inf
      %57 = vst [vmem:[#allocation3 + $0x40] sm:$0xff] -inf
      %58 = vst [vmem:[#allocation3 + $0x48] sm:$0xff] -inf
      %59 = vst [vmem:[#allocation3 + $0x50] sm:$0xff] -inf
      %60 = vst [vmem:[#allocation3 + $0x58] sm:$0xff] -inf
      %61 = vst [vmem:[#allocation3 + $0x60] sm:$0xff] -inf
      %62 = vst [vmem:[#allocation3 + $0x68] sm:$0xff] -inf
      %63 = vst [vmem:[#allocation3 + $0x70] sm:$0xff] -inf
      %64 = vst [vmem:[#allocation3 + $0x78] sm:$0xff] -inf
    $region21: #{tpu_custom_call.1} parent=1 // pred_fallthru
      _
    %v65 = vld [vmem:[#allocation2] sm:$0xff]
    %v66 = vld [vmem:[#allocation2 + $0x8] sm:$0xff]
    %v67 = vld [vmem:[#allocation2 + $0x10] sm:$0xff]
    %v68 = vld [vmem:[#allocation2 + $0x18] sm:$0xff]
    %v69 = vld [vmem:[#allocation2 + $0x20] sm:$0xff]
    %v70 = vld [vmem:[#allocation2 + $0x28] sm:$0xff]
    %v71 = vld [vmem:[#allocation2 + $0x30] sm:$0xff]
    %v72 = vld [vmem:[#allocation2 + $0x38] sm:$0xff]
    %v73 = vld [vmem:[#allocation2 + $0x40] sm:$0xff]
    %v74 = vld [vmem:[#allocation2 + $0x48] sm:$0xff]
    %v75 = vld [vmem:[#allocation2 + $0x50] sm:$0xff]
    %v76 = vld [vmem:[#allocation2 + $0x58] sm:$0xff]
    %v77 = vld [vmem:[#allocation2 + $0x60] sm:$0xff]
    %v78 = vld [vmem:[#allocation2 + $0x68] sm:$0xff]
    %v79 = vld [vmem:[#allocation2 + $0x70] sm:$0xff]
    %v80 = vld [vmem:[#allocation2 + $0x78] sm:$0xff]
    %v81 = vld [vmem:[#allocation3] sm:$0xff]
    %v82 = vld [vmem:[#allocation3 + $0x8] sm:$0xff]
    %v83 = vld [vmem:[#allocation3 + $0x10] sm:$0xff]
    %v84 = vld [vmem:[#allocation3 + $0x18] sm:$0xff]
    %v85 = vld [vmem:[#allocation3 + $0x20] sm:$0xff]
    %v86 = vld [vmem:[#allocation3 + $0x28] sm:$0xff]
    %v87 = vld [vmem:[#allocation3 + $0x30] sm:$0xff]
    %v88 = vld [vmem:[#allocation3 + $0x38] sm:$0xff]
    %v89 = vld [vmem:[#allocation3 + $0x40] sm:$0xff]
    %v90 = vld [vmem:[#allocation3 + $0x48] sm:$0xff]
    %v91 = vld [vmem:[#allocation3 + $0x50] sm:$0xff]
    %v92 = vld [vmem:[#allocation3 + $0x58] sm:$0xff]
    %v93 = vld [vmem:[#allocation3 + $0x60] sm:$0xff]
    %v94 = vld [vmem:[#allocation3 + $0x68] sm:$0xff]
    %v95 = vld [vmem:[#allocation3 + $0x70] sm:$0xff]
    %v96 = vld [vmem:[#allocation3 + $0x78] sm:$0xff]
    %v97 = vld [vmem:[#allocation4] sm:$0xff]
    %v98 = vld [vmem:[#allocation4 + $0x10] sm:$0xff]
    %v99 = vld [vmem:[#allocation4 + $0x20] sm:$0xff]
    %v100 = vld [vmem:[#allocation4 + $0x30] sm:$0xff]
    %v101 = vld [vmem:[#allocation4 + $0x40] sm:$0xff]
    %v102 = vld [vmem:[#allocation4 + $0x50] sm:$0xff]
    %v103 = vld [vmem:[#allocation4 + $0x60] sm:$0xff]
    %v104 = vld [vmem:[#allocation4 + $0x70] sm:$0xff]
    %v105 = vld [vmem:[#allocation4 + $0x80] sm:$0xff]
    %v106 = vld [vmem:[#allocation4 + $0x90] sm:$0xff]
    %v107 = vld [vmem:[#allocation4 + $0xa0] sm:$0xff]
    %v108 = vld [vmem:[#allocation4 + $0xb0] sm:$0xff]
    %v109 = vld [vmem:[#allocation4 + $0xc0] sm:$0xff]
    %v110 = vld [vmem:[#allocation4 + $0xd0] sm:$0xff]
    %v111 = vld [vmem:[#allocation4 + $0xe0] sm:$0xff]
    %v112 = vld [vmem:[#allocation4 + $0xf0] sm:$0xff]
    %v113 = vadd.f32 %v65, %v97
    %v114 = vadd.f32 %v66, %v98
    %v115 = vadd.f32 %v67, %v99
    %v116 = vadd.f32 %v68, %v100
    %v117 = vadd.f32 %v69, %v101
    %v118 = vadd.f32 %v70, %v102
    %v119 = vadd.f32 %v71, %v103
    %v120 = vadd.f32 %v72, %v104
    %v121 = vadd.f32 %v73, %v105
    %v122 = vadd.f32 %v74, %v106
    %v123 = vadd.f32 %v75, %v107
    %v124 = vadd.f32 %v76, %v108
    %v125 = vadd.f32 %v77, %v109
    %v126 = vadd.f32 %v78, %v110
    %v127 = vadd.f32 %v79, %v111
    %v128 = vadd.f32 %v80, %v112
    %v129 = vmax.f32 %v81, %v97
    %v130 = vmax.f32 %v82, %v98
    %v131 = vmax.f32 %v83, %v99
    %v132 = vmax.f32 %v84, %v100
    %v133 = vmax.f32 %v85, %v101
    %v134 = vmax.f32 %v86, %v102
    %v135 = vmax.f32 %v87, %v103
    %v136 = vmax.f32 %v88, %v104
    %v137 = vmax.f32 %v89, %v105
    %v138 = vmax.f32 %v90, %v106
    %v139 = vmax.f32 %v91, %v107
    %v140 = vmax.f32 %v92, %v108
    %v141 = vmax.f32 %v93, %v109
    %v142 = vmax.f32 %v94, %v110
    %v143 = vmax.f32 %v95, %v111
    %v144 = vmax.f32 %v96, %v112
    %v145 = vld [vmem:[#allocation4 + $0x8] sm:$0xff]
    %v146 = vld [vmem:[#allocation4 + $0x18] sm:$0xff]
    %v147 = vld [vmem:[#allocation4 + $0x28] sm:$0xff]
    %v148 = vld [vmem:[#allocation4 + $0x38] sm:$0xff]
    %v149 = vld [vmem:[#allocation4 + $0x48] sm:$0xff]
    %v150 = vld [vmem:[#allocation4 + $0x58] sm:$0xff]
    %v151 = vld [vmem:[#allocation4 + $0x68] sm:$0xff]
    %v152 = vld [vmem:[#allocation4 + $0x78] sm:$0xff]
    %v153 = vld [vmem:[#allocation4 + $0x88] sm:$0xff]
    %v154 = vld [vmem:[#allocation4 + $0x98] sm:$0xff]
    %v155 = vld [vmem:[#allocation4 + $0xa8] sm:$0xff]
    %v156 = vld [vmem:[#allocation4 + $0xb8] sm:$0xff]
    %v157 = vld [vmem:[#allocation4 + $0xc8] sm:$0xff]
    %v158 = vld [vmem:[#allocation4 + $0xd8] sm:$0xff]
    %v159 = vld [vmem:[#allocation4 + $0xe8] sm:$0xff]
    %v160 = vld [vmem:[#allocation4 + $0xf8] sm:$0xff]
    %v161 = vadd.f32 %v113, %v145
    %v162 = vadd.f32 %v114, %v146
    %v163 = vadd.f32 %v115, %v147
    %v164 = vadd.f32 %v116, %v148
    %v165 = vadd.f32 %v117, %v149
    %v166 = vadd.f32 %v118, %v150
    %v167 = vadd.f32 %v119, %v151
    %v168 = vadd.f32 %v120, %v152
    %v169 = vadd.f32 %v121, %v153
    %v170 = vadd.f32 %v122, %v154
    %v171 = vadd.f32 %v123, %v155
    %v172 = vadd.f32 %v124, %v156
    %v173 = vadd.f32 %v125, %v157
    %v174 = vadd.f32 %v126, %v158
    %v175 = vadd.f32 %v127, %v159
    %v176 = vadd.f32 %v128, %v160
    %v177 = vmax.f32 %v129, %v145
    %v178 = vmax.f32 %v130, %v146
    %v179 = vmax.f32 %v131, %v147
    %v180 = vmax.f32 %v132, %v148
    %v181 = vmax.f32 %v133, %v149
    %v182 = vmax.f32 %v134, %v150
    %v183 = vmax.f32 %v135, %v151
    %v184 = vmax.f32 %v136, %v152
    %v185 = vmax.f32 %v137, %v153
    %v186 = vmax.f32 %v138, %v154
    %v187 = vmax.f32 %v139, %v155
    %v188 = vmax.f32 %v140, %v156
    %v189 = vmax.f32 %v141, %v157
    %v190 = vmax.f32 %v142, %v158
    %v191 = vmax.f32 %v143, %v159
    %v192 = vmax.f32 %v144, %v160
    %193 = vst [vmem:[#allocation2] sm:$0xff] %v161
    %194 = vst [vmem:[#allocation2 + $0x8] sm:$0xff] %v162
    %195 = vst [vmem:[#allocation2 + $0x10] sm:$0xff] %v163
    %196 = vst [vmem:[#allocation2 + $0x18] sm:$0xff] %v164
    %197 = vst [vmem:[#allocation2 + $0x20] sm:$0xff] %v165
    %198 = vst [vmem:[#allocation2 + $0x28] sm:$0xff] %v166
    %199 = vst [vmem:[#allocation2 + $0x30] sm:$0xff] %v167
    %200 = vst [vmem:[#allocation2 + $0x38] sm:$0xff] %v168
    %201 = vst [vmem:[#allocation2 + $0x40] sm:$0xff] %v169
    %202 = vst [vmem:[#allocation2 + $0x48] sm:$0xff] %v170
    %203 = vst [vmem:[#allocation2 + $0x50] sm:$0xff] %v171
    %204 = vst [vmem:[#allocation2 + $0x58] sm:$0xff] %v172
    %205 = vst [vmem:[#allocation2 + $0x60] sm:$0xff] %v173
    %206 = vst [vmem:[#allocation2 + $0x68] sm:$0xff] %v174
    %207 = vst [vmem:[#allocation2 + $0x70] sm:$0xff] %v175
    %208 = vst [vmem:[#allocation2 + $0x78] sm:$0xff] %v176
    %209 = vst [vmem:[#allocation3] sm:$0xff] %v177
    %210 = vst [vmem:[#allocation3 + $0x8] sm:$0xff] %v178
    %211 = vst [vmem:[#allocation3 + $0x10] sm:$0xff] %v179
    %212 = vst [vmem:[#allocation3 + $0x18] sm:$0xff] %v180
    %213 = vst [vmem:[#allocation3 + $0x20] sm:$0xff] %v181
    %214 = vst [vmem:[#allocation3 + $0x28] sm:$0xff] %v182
    %215 = vst [vmem:[#allocation3 + $0x30] sm:$0xff] %v183
    %216 = vst [vmem:[#allocation3 + $0x38] sm:$0xff] %v184
    %217 = vst [vmem:[#allocation3 + $0x40] sm:$0xff] %v185
    %218 = vst [vmem:[#allocation3 + $0x48] sm:$0xff] %v186
    %219 = vst [vmem:[#allocation3 + $0x50] sm:$0xff] %v187
    %220 = vst [vmem:[#allocation3 + $0x58] sm:$0xff] %v188
    %221 = vst [vmem:[#allocation3 + $0x60] sm:$0xff] %v189
    %222 = vst [vmem:[#allocation3 + $0x68] sm:$0xff] %v190
    %223 = vst [vmem:[#allocation3 + $0x70] sm:$0xff] %v191
    %224 = vst [vmem:[#allocation3 + $0x78] sm:$0xff] %v192
    // Predicated region
    $region22: #{tpu_custom_call.1} parent=1 // pred_check
      %p225 = pneg %p29
    $region23: #{tpu_custom_call.1} parent=1 // pred_check_branch
      %227 = sbr.rel (%p225) target = $region25
    $region24: #{tpu_custom_call.1} parent=1 // pred_region
      %v228 = vld [vmem:[#allocation2] sm:$0xff]
      %v229 = vld [vmem:[#allocation2 + $0x8] sm:$0xff]
      %v230 = vld [vmem:[#allocation2 + $0x10] sm:$0xff]
      %v231 = vld [vmem:[#allocation2 + $0x18] sm:$0xff]
      %v232 = vld [vmem:[#allocation2 + $0x20] sm:$0xff]
      %v233 = vld [vmem:[#allocation2 + $0x28] sm:$0xff]
      %v234 = vld [vmem:[#allocation2 + $0x30] sm:$0xff]
      %v235 = vld [vmem:[#allocation2 + $0x38] sm:$0xff]
      %v236 = vld [vmem:[#allocation2 + $0x40] sm:$0xff]
      %v237 = vld [vmem:[#allocation2 + $0x48] sm:$0xff]
      %v238 = vld [vmem:[#allocation2 + $0x50] sm:$0xff]
      %v239 = vld [vmem:[#allocation2 + $0x58] sm:$0xff]
      %v240 = vld [vmem:[#allocation2 + $0x60] sm:$0xff]
      %v241 = vld [vmem:[#allocation2 + $0x68] sm:$0xff]
      %v242 = vld [vmem:[#allocation2 + $0x70] sm:$0xff]
      %v243 = vld [vmem:[#allocation2 + $0x78] sm:$0xff]
      %244 = vadd.xlane.f32.xlu0 %v228
      %v245 = vpop.xlane.xlu0 %244
      %246 = vadd.xlane.f32.xlu0 %v229
      %v247 = vpop.xlane.xlu0 %246
      %248 = vadd.xlane.f32.xlu0 %v230
      %v249 = vpop.xlane.xlu0 %248
      %250 = vadd.xlane.f32.xlu0 %v231
      %v251 = vpop.xlane.xlu0 %250
      %252 = vadd.xlane.f32.xlu0 %v232
      %v253 = vpop.xlane.xlu0 %252
      %254 = vadd.xlane.f32.xlu0 %v233
      %v255 = vpop.xlane.xlu0 %254
      %256 = vadd.xlane.f32.xlu0 %v234
      %v257 = vpop.xlane.xlu0 %256
      %258 = vadd.xlane.f32.xlu0 %v235
      %v259 = vpop.xlane.xlu0 %258
      %260 = vadd.xlane.f32.xlu0 %v236
      %v261 = vpop.xlane.xlu0 %260
      %262 = vadd.xlane.f32.xlu0 %v237
      %v263 = vpop.xlane.xlu0 %262
      %264 = vadd.xlane.f32.xlu0 %v238
      %v265 = vpop.xlane.xlu0 %264
      %266 = vadd.xlane.f32.xlu0 %v239
      %v267 = vpop.xlane.xlu0 %266
      %268 = vadd.xlane.f32.xlu0 %v240
      %v269 = vpop.xlane.xlu0 %268
      %270 = vadd.xlane.f32.xlu0 %v241
      %v271 = vpop.xlane.xlu0 %270
      %272 = vadd.xlane.f32.xlu0 %v242
      %v273 = vpop.xlane.xlu0 %272
      %274 = vadd.xlane.f32.xlu0 %v243
      %v275 = vpop.xlane.xlu0 %274
      %v276 = vmul.f32 %v245, 0.00390625
      %v277 = vmul.f32 %v247, 0.00390625
      %v278 = vmul.f32 %v249, 0.00390625
      %v279 = vmul.f32 %v251, 0.00390625
      %v280 = vmul.f32 %v253, 0.00390625
      %v281 = vmul.f32 %v255, 0.00390625
      %v282 = vmul.f32 %v257, 0.00390625
      %v283 = vmul.f32 %v259, 0.00390625
      %v284 = vmul.f32 %v261, 0.00390625
      %v285 = vmul.f32 %v263, 0.00390625
      %v286 = vmul.f32 %v265, 0.00390625
      %v287 = vmul.f32 %v267, 0.00390625
      %v288 = vmul.f32 %v269, 0.00390625
      %v289 = vmul.f32 %v271, 0.00390625
      %v290 = vmul.f32 %v273, 0.00390625
      %v291 = vmul.f32 %v275, 0.00390625
      %v292 = vld [vmem:[#allocation3] sm:$0xff]
      %v293 = vld [vmem:[#allocation3 + $0x8] sm:$0xff]
      %v294 = vld [vmem:[#allocation3 + $0x10] sm:$0xff]
      %v295 = vld [vmem:[#allocation3 + $0x18] sm:$0xff]
      %v296 = vld [vmem:[#allocation3 + $0x20] sm:$0xff]
      %v297 = vld [vmem:[#allocation3 + $0x28] sm:$0xff]
      %v298 = vld [vmem:[#allocation3 + $0x30] sm:$0xff]
      %v299 = vld [vmem:[#allocation3 + $0x38] sm:$0xff]
      %v300 = vld [vmem:[#allocation3 + $0x40] sm:$0xff]
      %v301 = vld [vmem:[#allocation3 + $0x48] sm:$0xff]
      %v302 = vld [vmem:[#allocation3 + $0x50] sm:$0xff]
      %v303 = vld [vmem:[#allocation3 + $0x58] sm:$0xff]
      %v304 = vld [vmem:[#allocation3 + $0x60] sm:$0xff]
      %v305 = vld [vmem:[#allocation3 + $0x68] sm:$0xff]
      %v306 = vld [vmem:[#allocation3 + $0x70] sm:$0xff]
      %v307 = vld [vmem:[#allocation3 + $0x78] sm:$0xff]
      %308 = vmax.xlane.f32.xlu0 %v292
      %v309 = vpop.xlane.xlu0 %308
      %310 = vmax.xlane.f32.xlu0 %v293
      %v311 = vpop.xlane.xlu0 %310
      %312 = vmax.xlane.f32.xlu0 %v294
      %v313 = vpop.xlane.xlu0 %312
      %314 = vmax.xlane.f32.xlu0 %v295
      %v315 = vpop.xlane.xlu0 %314
      %316 = vmax.xlane.f32.xlu0 %v296
      %v317 = vpop.xlane.xlu0 %316
      %318 = vmax.xlane.f32.xlu0 %v297
      %v319 = vpop.xlane.xlu0 %318
      %320 = vmax.xlane.f32.xlu0 %v298
      %v321 = vpop.xlane.xlu0 %320
      %322 = vmax.xlane.f32.xlu0 %v299
      %v323 = vpop.xlane.xlu0 %322
      %324 = vmax.xlane.f32.xlu0 %v300
      %v325 = vpop.xlane.xlu0 %324
      %326 = vmax.xlane.f32.xlu0 %v301
      %v327 = vpop.xlane.xlu0 %326
      %328 = vmax.xlane.f32.xlu0 %v302
      %v329 = vpop.xlane.xlu0 %328
      %330 = vmax.xlane.f32.xlu0 %v303
      %v331 = vpop.xlane.xlu0 %330
      %332 = vmax.xlane.f32.xlu0 %v304
      %v333 = vpop.xlane.xlu0 %332
      %334 = vmax.xlane.f32.xlu0 %v305
      %v335 = vpop.xlane.xlu0 %334
      %336 = vmax.xlane.f32.xlu0 %v306
      %v337 = vpop.xlane.xlu0 %336
      %338 = vmax.xlane.f32.xlu0 %v307
      %v339 = vpop.xlane.xlu0 %338
      %v356 = vlaneseq
      %v357 = vand.u32 %v356, 127
      %v358 = vlaneseq
      %v359 = vshrl.u32 %v358, 7
      %v360 = vsub.s32 %v357, %v359
      %v361 = vrot.slane %v276, %v360
      %v362 = vadd.s32 %v357, 4294967288
      %v363 = vlaneseq
      %v364 = vshrl.u32 %v363, 7
      %v365 = vsub.s32 %v362, %v364
      %v366 = vrot.slane %v277, %v365
      %vm367 = vcmask 130112
      %v368 = vsel %vm367, %v366, %v361
      %v369 = vadd.s32 %v357, 4294967280
      %v370 = vlaneseq
      %v371 = vshrl.u32 %v370, 7
      %v372 = vsub.s32 %v369, %v371
      %v373 = vrot.slane %v278, %v372
      %vm374 = vcmask 195712
      %v375 = vsel %vm374, %v373, %v368
      %v376 = vadd.s32 %v357, 4294967272
      %v377 = vlaneseq
      %v378 = vshrl.u32 %v377, 7
      %v379 = vsub.s32 %v376, %v378
      %v380 = vrot.slane %v279, %v379
      %vm381 = vcmask 261312
      %v382 = vsel %vm381, %v380, %v375
      %v383 = vadd.s32 %v357, 4294967264
      %v384 = vlaneseq
      %v385 = vshrl.u32 %v384, 7
      %v386 = vsub.s32 %v383, %v385
      %v387 = vrot.slane %v280, %v386
      %vm388 = vcmask 326912
      %v389 = vsel %vm388, %v387, %v382
      %v390 = vadd.s32 %v357, 4294967256
      %v391 = vlaneseq
      %v392 = vshrl.u32 %v391, 7
      %v393 = vsub.s32 %v390, %v392
      %v394 = vrot.slane %v281, %v393
      %vm395 = vcmask 392512
      %v396 = vsel %vm395, %v394, %v389
      %v397 = vadd.s32 %v357, 4294967248
      %v398 = vlaneseq
      %v399 = vshrl.u32 %v398, 7
      %v400 = vsub.s32 %v397, %v399
      %v401 = vrot.slane %v282, %v400
      %vm402 = vcmask 458112
      %v403 = vsel %vm402, %v401, %v396
      %v404 = vadd.s32 %v357, 4294967240
      %v405 = vlaneseq
      %v406 = vshrl.u32 %v405, 7
      %v407 = vsub.s32 %v404, %v406
      %v408 = vrot.slane %v283, %v407
      %vm409 = vcmask 523712
      %v410 = vsel %vm409, %v408, %v403
      %v411 = vlaneseq
      %v412 = vshrl.u32 %v411, 7
      %v413 = vsub.s32 %v357, %v412
      %v414 = vrot.slane %v284, %v413
      %v415 = vlaneseq
      %v416 = vshrl.u32 %v415, 7
      %v417 = vsub.s32 %v362, %v416
      %v418 = vrot.slane %v285, %v417
      %v419 = vsel %vm367, %v418, %v414
      %v420 = vlaneseq
      %v421 = vshrl.u32 %v420, 7
      %v422 = vsub.s32 %v369, %v421
      %v423 = vrot.slane %v286, %v422
      %v424 = vsel %vm374, %v423, %v419
      %v425 = vlaneseq
      %v426 = vshrl.u32 %v425, 7
      %v427 = vsub.s32 %v376, %v426
      %v428 = vrot.slane %v287, %v427
      %v429 = vsel %vm381, %v428, %v424
      %v430 = vlaneseq
      %v431 = vshrl.u32 %v430, 7
      %v432 = vsub.s32 %v383, %v431
      %v433 = vrot.slane %v288, %v432
      %v434 = vsel %vm388, %v433, %v429
      %v435 = vlaneseq
      %v436 = vshrl.u32 %v435, 7
      %v437 = vsub.s32 %v390, %v436
      %v438 = vrot.slane %v289, %v437
      %v439 = vsel %vm395, %v438, %v434
      %v440 = vlaneseq
      %v441 = vshrl.u32 %v440, 7
      %v442 = vsub.s32 %v397, %v441
      %v443 = vrot.slane %v290, %v442
      %v444 = vsel %vm402, %v443, %v439
      %v445 = vlaneseq
      %v446 = vshrl.u32 %v445, 7
      %v447 = vsub.s32 %v404, %v446
      %v448 = vrot.slane %v291, %v447
      %v449 = vsel %vm409, %v448, %v444
      %vm450 = vcmask 1041409
      %v451 = vsel %vm450, %v449, %v410
      %v469 = vlaneseq
      %v470 = vshrl.u32 %v469, 7
      %v471 = vsub.s32 %v357, %v470
      %v472 = vrot.slane %v309, %v471
      %v473 = vlaneseq
      %v474 = vshrl.u32 %v473, 7
      %v475 = vsub.s32 %v362, %v474
      %v476 = vrot.slane %v311, %v475
      %v477 = vsel %vm367, %v476, %v472
      %v478 = vlaneseq
      %v479 = vshrl.u32 %v478, 7
      %v480 = vsub.s32 %v369, %v479
      %v481 = vrot.slane %v313, %v480
      %v482 = vsel %vm374, %v481, %v477
      %v483 = vlaneseq
      %v484 = vshrl.u32 %v483, 7
      %v485 = vsub.s32 %v376, %v484
      %v486 = vrot.slane %v315, %v485
      %v487 = vsel %vm381, %v486, %v482
      %v488 = vlaneseq
      %v489 = vshrl.u32 %v488, 7
      %v490 = vsub.s32 %v383, %v489
      %v491 = vrot.slane %v317, %v490
      %v492 = vsel %vm388, %v491, %v487
      %v493 = vlaneseq
      %v494 = vshrl.u32 %v493, 7
      %v495 = vsub.s32 %v390, %v494
      %v496 = vrot.slane %v319, %v495
      %v497 = vsel %vm395, %v496, %v492
      %v498 = vlaneseq
      %v499 = vshrl.u32 %v498, 7
      %v500 = vsub.s32 %v397, %v499
      %v501 = vrot.slane %v321, %v500
      %v502 = vsel %vm402, %v501, %v497
      %v503 = vlaneseq
      %v504 = vshrl.u32 %v503, 7
      %v505 = vsub.s32 %v404, %v504
      %v506 = vrot.slane %v323, %v505
      %v507 = vsel %vm409, %v506, %v502
      %v508 = vlaneseq
      %v509 = vshrl.u32 %v508, 7
      %v510 = vsub.s32 %v357, %v509
      %v511 = vrot.slane %v325, %v510
      %v512 = vlaneseq
      %v513 = vshrl.u32 %v512, 7
      %v514 = vsub.s32 %v362, %v513
      %v515 = vrot.slane %v327, %v514
      %v516 = vsel %vm367, %v515, %v511
      %v517 = vlaneseq
      %v518 = vshrl.u32 %v517, 7
      %v519 = vsub.s32 %v369, %v518
      %v520 = vrot.slane %v329, %v519
      %v521 = vsel %vm374, %v520, %v516
      %v522 = vlaneseq
      %v523 = vshrl.u32 %v522, 7
      %v524 = vsub.s32 %v376, %v523
      %v525 = vrot.slane %v331, %v524
      %v526 = vsel %vm381, %v525, %v521
      %v527 = vlaneseq
      %v528 = vshrl.u32 %v527, 7
      %v529 = vsub.s32 %v383, %v528
      %v530 = vrot.slane %v333, %v529
      %v531 = vsel %vm388, %v530, %v526
      %v532 = vlaneseq
      %v533 = vshrl.u32 %v532, 7
      %v534 = vsub.s32 %v390, %v533
      %v535 = vrot.slane %v335, %v534
      %v536 = vsel %vm395, %v535, %v531
      %v537 = vlaneseq
      %v538 = vshrl.u32 %v537, 7
      %v539 = vsub.s32 %v397, %v538
      %v540 = vrot.slane %v337, %v539
      %v541 = vsel %vm402, %v540, %v536
      %v542 = vlaneseq
      %v543 = vshrl.u32 %v542, 7
      %v544 = vsub.s32 %v404, %v543
      %v545 = vrot.slane %v339, %v544
      %v546 = vsel %vm409, %v545, %v541
      %vm547 = vcmask 1043459
      %v548 = vsel %vm547, %v546, %v507
      %vm550 = vcmask 1041408
      %v551 = vsel %vm550, %v451, %v548
      %v552 = vld [vmem:[%s1] sm:$0xff]
      %v553 = vld [vmem:[%s1 + $0x8] sm:$0xff]
      %v554 = vld [vmem:[%s1 + $0x10] sm:$0xff]
      %v555 = vld [vmem:[%s1 + $0x18] sm:$0xff]
      %v556 = vld [vmem:[%s1 + $0x20] sm:$0xff]
      %v557 = vld [vmem:[%s1 + $0x28] sm:$0xff]
      %v558 = vld [vmem:[%s1 + $0x30] sm:$0xff]
      %v559 = vld [vmem:[%s1 + $0x38] sm:$0xff]
      %vm560 = vcmask 523264
      %v562 = vsel %vm560, %v551, 0
      %564 = vmatprep.subr.mxu0 0.0
      %565 = vmatpush1.msra.mxu0 0.0
      %566 = vmatprep.subr.mxu0 0.0
      %567 = vmatpush1.msra.mxu0 0.0
      %568 = vmatprep.subr.mxu0 0.0
      %569 = vmatpush1.msra.mxu0 0.0
      %570 = vmatprep.subr.mxu0 0.0
      %571 = vmatpush1.msra.mxu0 0.0
      %572 = vmatprep.subr.mxu0 0.0
      %573 = vmatpush1.msra.mxu0 0.0
      %574 = vmatprep.subr.mxu0 0.0
      %575 = vmatpush1.msra.mxu0 0.0
      %576 = vmatprep.subr.mxu0 0.0
      %577 = vmatpush1.msra.mxu0 0.0
      %578 = vmatprep.subr.mxu0 0.0
      %579 = vmatpush1.msra.mxu0 0.0
      %580 = vmatprep.subr.mxu0 0.0
      %581 = vmatpush1.msra.mxu0 %v559
      %582 = vmatprep.subr.mxu0 0.0
      %583 = vmatpush1.msra.mxu0 %v558
      %584 = vmatprep.subr.mxu0 0.0
      %585 = vmatpush1.msra.mxu0 %v557
      %586 = vmatprep.subr.mxu0 0.0
      %587 = vmatpush1.msra.mxu0 %v556
      %588 = vmatprep.subr.mxu0 0.0
      %589 = vmatpush1.msra.mxu0 %v555
      %590 = vmatprep.subr.mxu0 0.0
      %591 = vmatpush1.msra.mxu0 %v554
      %592 = vmatprep.subr.mxu0 0.0
      %593 = vmatpush1.msra.mxu0 %v553
      %594 = vmatprep.subr.mxu0 0.0
      %595 = vmatpush1.msra.mxu0 %v552
      %596 = vmatprep.subr.mxu0 0.0
      %597 = vmatpush2.msra.mxu0 0.0
      %598 = vmatprep.subr.mxu0 0.0
      %599 = vmatpush2.msra.mxu0 0.0
      %600 = vmatprep.subr.mxu0 0.0
      %601 = vmatpush2.msra.mxu0 0.0
      %602 = vmatprep.subr.mxu0 0.0
      %603 = vmatpush2.msra.mxu0 0.0
      %604 = vmatprep.subr.mxu0 0.0
      %605 = vmatpush2.msra.mxu0 0.0
      %606 = vmatprep.subr.mxu0 0.0
      %607 = vmatpush2.msra.mxu0 0.0
      %608 = vmatprep.subr.mxu0 0.0
      %609 = vmatpush2.msra.mxu0 0.0
      %610 = vmatprep.subr.mxu0 0.0
      %611 = vmatpush2.msra.mxu0 0.0
      %612 = vmatprep.subr.mxu0 0.0
      %613 = vmatpush2.msra.mxu0 0.0
      %614 = vmatprep.subr.mxu0 0.0
      %615 = vmatpush2.msra.mxu0 0.0
      %616 = vmatprep.subr.mxu0 0.0
      %617 = vmatpush2.msra.mxu0 0.0
      %618 = vmatprep.subr.mxu0 0.0
      %619 = vmatpush2.msra.mxu0 0.0
      %620 = vmatprep.subr.mxu0 0.0
      %621 = vmatpush2.msra.mxu0 0.0
      %622 = vmatprep.subr.mxu0 0.0
      %623 = vmatpush2.msra.mxu0 0.0
      %624 = vmatprep.subr.mxu0 0.0
      %625 = vmatpush2.msra.mxu0 0.0
      %626 = vmatprep.subr.mxu0 0.0
      %627 = vmatpush2.msra.mxu0 0.0
      %628 = vmatprep.mubr.f32.mxu0 0.0
      %629 = vmatmul.mubr.f32.gmra.mxu0 %v562
      %v630 = vpop.f32.mrf.mxu0
      %v631 = vadd.f32 0.0, %v630
      %v632 = vpop.f32.mrf.mxu0
      %633 = vdwg.mxu0
      %v634 = vxor.u32 %v631, 2147483648
      %v635 = vmul.f32 %v634, 1.442695
      %v636 = vpow.pop %v635
      %v637 = vadd.f32 %v636, 1.0
      %v638 = vrcp.pop %v637
      %v639 = vmul.f32 1.0, %v638
      %v640 = vmul.f32 %v631, %v639
      %v641 = vld [vmem:[%s2] sm:$0xf]
      %vm642 = vcmask 31744
      %v644 = vsel %vm642, %v640, 0
      %vm646 = vcmask 1043456
      %v648 = vsel %vm646, %v641, 0
      %650 = vmatprep.subr.mxu0 0.0
      %651 = vmatpush1.msra.mxu0 0.0
      %652 = vmatprep.subr.mxu0 0.0
      %653 = vmatpush1.msra.mxu0 0.0
      %654 = vmatprep.subr.mxu0 0.0
      %655 = vmatpush1.msra.mxu0 0.0
      %656 = vmatprep.subr.mxu0 0.0
      %657 = vmatpush1.msra.mxu0 0.0
      %658 = vmatprep.subr.mxu0 0.0
      %659 = vmatpush1.msra.mxu0 0.0
      %660 = vmatprep.subr.mxu0 0.0
      %661 = vmatpush1.msra.mxu0 0.0
      %662 = vmatprep.subr.mxu0 0.0
      %663 = vmatpush1.msra.mxu0 0.0
      %664 = vmatprep.subr.mxu0 0.0
      %665 = vmatpush1.msra.mxu0 0.0
      %666 = vmatprep.subr.mxu0 0.0
      %667 = vmatpush1.msra.mxu0 0.0
      %668 = vmatprep.subr.mxu0 0.0
      %669 = vmatpush1.msra.mxu0 0.0
      %670 = vmatprep.subr.mxu0 0.0
      %671 = vmatpush1.msra.mxu0 0.0
      %672 = vmatprep.subr.mxu0 0.0
      %673 = vmatpush1.msra.mxu0 0.0
      %674 = vmatprep.subr.mxu0 0.0
      %675 = vmatpush1.msra.mxu0 0.0
      %676 = vmatprep.subr.mxu0 0.0
      %677 = vmatpush1.msra.mxu0 0.0
      %678 = vmatprep.subr.mxu0 0.0
      %679 = vmatpush1.msra.mxu0 0.0
      %680 = vmatprep.subr.mxu0 0.0
      %681 = vmatpush1.msra.mxu0 %v648
      %682 = vmatprep.subr.mxu0 0.0
      %683 = vmatpush2.msra.mxu0 0.0
      %684 = vmatprep.subr.mxu0 0.0
      %685 = vmatpush2.msra.mxu0 0.0
      %686 = vmatprep.subr.mxu0 0.0
      %687 = vmatpush2.msra.mxu0 0.0
      %688 = vmatprep.subr.mxu0 0.0
      %689 = vmatpush2.msra.mxu0 0.0
      %690 = vmatprep.subr.mxu0 0.0
      %691 = vmatpush2.msra.mxu0 0.0
      %692 = vmatprep.subr.mxu0 0.0
      %693 = vmatpush2.msra.mxu0 0.0
      %694 = vmatprep.subr.mxu0 0.0
      %695 = vmatpush2.msra.mxu0 0.0
      %696 = vmatprep.subr.mxu0 0.0
      %697 = vmatpush2.msra.mxu0 0.0
      %698 = vmatprep.subr.mxu0 0.0
      %699 = vmatpush2.msra.mxu0 0.0
      %700 = vmatprep.subr.mxu0 0.0
      %701 = vmatpush2.msra.mxu0 0.0
      %702 = vmatprep.subr.mxu0 0.0
      %703 = vmatpush2.msra.mxu0 0.0
      %704 = vmatprep.subr.mxu0 0.0
      %705 = vmatpush2.msra.mxu0 0.0
      %706 = vmatprep.subr.mxu0 0.0
      %707 = vmatpush2.msra.mxu0 0.0
      %708 = vmatprep.subr.mxu0 0.0
      %709 = vmatpush2.msra.mxu0 0.0
      %710 = vmatprep.subr.mxu0 0.0
      %711 = vmatpush2.msra.mxu0 0.0
      %712 = vmatprep.subr.mxu0 0.0
      %713 = vmatpush2.msra.mxu0 0.0
      %714 = vmatprep.mubr.f32.mxu0 0.0
      %715 = vmatmul.mubr.f32.gmra.mxu0 %v644
      %v716 = vpop.f32.mrf.mxu0
      %v717 = vadd.f32 0.0, %v716
      %v718 = vpop.f32.mrf.mxu0
      %719 = vdwg.mxu0
      %v721 = vrot.slane %v717, 2
      %v723 = vadd.f32 %v717, %v721
      %v724 = vxor.u32 %v723, 2147483648
      %v725 = vmul.f32 %v724, 1.442695
      %v726 = vpow.pop %v725
      %v727 = vadd.f32 %v726, 1.0
      %v728 = vrcp.pop %v727
      %v729 = vmul.f32 1.0, %v728
      %vm730 = vcmask 517120
      %731 = vst.msk [vmem:[#allocation7] sm:$0x3] %vm730, %v729
    $region25: #{tpu_custom_call.1} parent=1 // pred_fallthru
      _
    // Predicated region
    $region26: #{tpu_custom_call.1} parent=1 // pred_check
      _
    $region27: #{tpu_custom_call.1} parent=1 // pred_check_branch
      %733 = sbr.rel (0) target = $region29
    $region28: #{tpu_custom_call.1} parent=1 // pred_region
      %s735 = ssub.s32 32, 32
      %736 = vsyncadd [#allocation6], %s735
      %s738 = sshll.u32 [#allocation7], 4
      %s739 = int_to_ptr.vmem [resolvable:$true] %s738
      %741 = dma.vmem_to_hbm [thread:$0]  %s739, 32, %s3, [#allocation6]
    $region29: #{tpu_custom_call.1} parent=1 // pred_fallthru
      _
    // Predicated region
    $region30: #{tpu_custom_call.1} parent=1 // pred_check
      _
    $region31: #{tpu_custom_call.1} parent=1 // pred_check_branch
      %743 = sbr.rel (0) target = $region33
    $region32: #{tpu_custom_call.1} parent=1 // pred_region
      %744 = dma.done [#allocation6], 32
    $region33: #{tpu_custom_call.1} parent=1 // pred_fallthru
      _
    %745 = vsyncpa [#allocation5], 1
    %746 = vsyncpa [#allocation6], 1

</llo_original>
